<compile_context>
chip_gen: v7x
topology: tpu7x:2x2x1
jax: 0.10.0
libtpu: 0.0.40
codegen_flags: <defaults>
</compile_context>

<pallas_src>
import math

import jax
import jax.numpy as jnp
import numpy as np
from jax.experimental import pallas as pl
from jax.experimental.pallas import tpu as pltpu


# ------------------------ QKV projection (runs once) ------------------------ #
def qkv_proj_kernel(x_ref, wq_ref, wk_ref, wv_ref, bq_ref, bk_ref, bv_ref,
                    q_ref, k_ref, v_ref):
    x = x_ref[...]
    q_ref[...] = (jnp.dot(x, wq_ref[...], preferred_element_type=jnp.float32)
                  + bq_ref[...])
    k_ref[...] = (jnp.dot(x, wk_ref[...], preferred_element_type=jnp.float32)
                  + bk_ref[...])
    v_ref[...] = (jnp.dot(x, wv_ref[...], preferred_element_type=jnp.float32)
                  + bv_ref[...])


# ------------------------------ main kernel --------------------------------- #
def gofeature_kernel(q_ref, k_ref, v_ref, w1_ref, b1_ref, w2_ref, b2_ref,
                     o_ref, m_sc, acc_sc):
    """Flash-style attention over the kv grid axis + fused conv1/conv2 matmuls.

    q_ref : (bq, C)      query rows for this block (scale pre-folded)
    k_ref : (bk, C)      kv tile
    v_ref : (bk, C+1)    kv tile of V with a trailing ones column (denominator)
    w1_ref: (C, C*HID)   banded conv1 weight      b1_ref: (1, C*HID)
    w2_ref: (C*HID, C*Co) block-diag conv2 weight b2_ref: (1, C*Co)
    o_ref : (bq, C*Co)   lane-dense output slab
    m_sc  : (bq, 1)      running max     acc_sc: (bq, C+1) running p@[V|1]
    """
    kv = pl.program_id(1)

    @pl.when(kv == 0)
    def _():
        m_sc[...] = jnp.full(m_sc.shape, -jnp.inf, m_sc.dtype)
        acc_sc[...] = jnp.zeros(acc_sc.shape, acc_sc.dtype)

    # scores for this kv tile (scale already folded into q)
    s = jnp.dot(q_ref[...], k_ref[...].T,
                preferred_element_type=jnp.float32)            # (bq, bk)
    m_new = jnp.maximum(m_sc[...], jnp.max(s, axis=-1, keepdims=True))
    alpha = jnp.exp(m_sc[...] - m_new)                          # (bq, 1)
    p = jnp.exp(s - m_new)                                      # (bq, bk)
    # accumulate p @ [V | 1]: last column carries the softmax denominator.
    acc_sc[...] = alpha * acc_sc[...] + jnp.dot(
        p, v_ref[...], preferred_element_type=jnp.float32)      # (bq, C+1)
    m_sc[...] = m_new

    @pl.when(kv == pl.num_programs(1) - 1)
    def _():
        c = w1_ref.shape[0]                                     # classes
        acc = acc_sc[...]
        a = acc[:, 0:c] * pl.reciprocal(acc[:, c:c + 1], approx=False)
        a = jnp.maximum(a, 0.0)                                 # relu(atten(x))
        # conv1 (k=3, pad=1) as one banded matmul, output already lane-flat.
        z1 = jnp.maximum(
            jnp.dot(a, w1_ref[...], preferred_element_type=jnp.float32)
            + b1_ref[...], 0.0)                                 # (bq, C*HID)
        # conv2 (k=3, pad=1) as one block-diagonal matmul -> (bq, C*Co).
        y = jnp.maximum(
            jnp.dot(z1, w2_ref[...], preferred_element_type=jnp.float32)
            + b2_ref[...], 0.0)
        o_ref[...] = y


# -------------------------------- wrapper ----------------------------------- #
def gofeature(x, params, *, block_q=None, block_kv=None, vmem_limit_bytes=None):
    n, f = x.shape
    classes = params['wq'].shape[1]
    hid = params['b1'].shape[1]
    co = params['b2'].shape[1]
    dt = jnp.float32

    # ---- trace-time folds -------------------------------------------------- #
    scale = 1.0 / math.sqrt(float(classes))
    wq_s = (params['wq'] * scale).astype(dt)
    bq_s = (params['bq'] * scale).astype(dt)
    wv_ext = jnp.concatenate([params['wv'], jnp.zeros((f, 1), dt)], axis=1)
    bv_ext = jnp.concatenate([params['bv'], jnp.ones((1, 1), dt)], axis=1)

    # banded conv1 weight: z1[n, l*hid + c] = sum_t a[n, l-1+t] * w1[t, c] + b1[c]
    w1 = params['w1']                                    # (3, hid)
    w1big = jnp.zeros((classes, classes * hid), dt)
    for l in range(classes):
        for t in range(3):
            lp = l - 1 + t
            if 0 <= lp < classes:
                w1big = w1big.at[lp, l * hid:(l + 1) * hid].set(w1[t])
    b1t = jnp.tile(params['b1'], (1, classes))           # (1, classes*hid)

    # block-diagonal conv2 weight:
    #   y[n, l*co + o] = sum_{l',c} z1[n, l'*hid + c] * w2_{l-l'+1}[c, o] + b2[o]
    w2taps = [params['w2k0'], params['w2k1'], params['w2k2']]   # each (hid, co)
    w2big = jnp.zeros((classes * hid, classes * co), dt)
    for l in range(classes):
        for t in range(3):
            lp = l - 1 + t
            if 0 <= lp < classes:
                w2big = w2big.at[lp * hid:(lp + 1) * hid,
                                 l * co:(l + 1) * co].set(w2taps[t])
    b2t = jnp.tile(params['b2'], (1, classes))            # (1, classes*co)

    # ---- block sizes -------------------------------------------------------- #
    if block_q is None:
        block_q = n if n <= 256 else 256
    if block_kv is None:
        block_kv = n if n <= 512 else 512
    assert n % block_q == 0 and n % block_kv == 0, \
        "N must be a multiple of block_q and block_kv"

    vmem_spec = pl.BlockSpec(memory_space=pltpu.MemorySpace.VMEM)

    # ---- QKV projection: computed ONCE, row-blocked ------------------------- #
    q, k, vext = pl.pallas_call(
        qkv_proj_kernel,
        out_shape=(jax.ShapeDtypeStruct((n, classes), dt),
                   jax.ShapeDtypeStruct((n, classes), dt),
                   jax.ShapeDtypeStruct((n, classes + 1), dt)),
        grid=(n // block_q,),
        in_specs=[pl.BlockSpec((block_q, f), lambda i: (i, 0))]
                 + [vmem_spec] * 6,
        out_specs=(pl.BlockSpec((block_q, classes), lambda i: (i, 0)),
                   pl.BlockSpec((block_q, classes), lambda i: (i, 0)),
                   pl.BlockSpec((block_q, classes + 1), lambda i: (i, 0))),
        compiler_params=pltpu.CompilerParams(
            dimension_semantics=("parallel",)),
    )(x.astype(dt), wq_s, params['wk'], wv_ext, bq_s, params['bk'], bv_ext)

    # ---- attention + conv chain --------------------------------------------- #
    grid = (n // block_q, n // block_kv)
    out = pl.pallas_call(
        gofeature_kernel,
        out_shape=jax.ShapeDtypeStruct((n, classes * co), dt),
        grid=grid,
        in_specs=[
            pl.BlockSpec((block_q, classes), lambda qi, ki: (qi, 0)),        # Q
            pl.BlockSpec((block_kv, classes), lambda qi, ki: (ki, 0)),       # K
            pl.BlockSpec((block_kv, classes + 1), lambda qi, ki: (ki, 0)),   # V|1
            vmem_spec,   # w1big  (classes, classes*hid)   resident
            vmem_spec,   # b1t    (1, classes*hid)
            vmem_spec,   # w2big  (classes*hid, classes*co)
            vmem_spec,   # b2t    (1, classes*co)
        ],
        out_specs=pl.BlockSpec((block_q, classes * co), lambda qi, ki: (qi, 0)),
        scratch_shapes=[
            pltpu.VMEM((block_q, 1), dt),            # running max
            pltpu.VMEM((block_q, classes + 1), dt),  # running p @ [V|1]
        ],
        compiler_params=pltpu.CompilerParams(
            dimension_semantics=("parallel", "arbitrary"),
            vmem_limit_bytes=vmem_limit_bytes),
    )(q, k, vext, w1big, b1t, w2big, b2t)

    return out.reshape(n, classes, co)


# --------------------------- pure-JAX reference ----------------------------- #
def gofeature_ref(x, p):
    q = x @ p['wq'] + p['bq']
    k = x @ p['wk'] + p['bk']
    v = x @ p['wv'] + p['bv']
    s = (q @ k.T) / math.sqrt(q.shape[-1])
    attn = jax.nn.softmax(s, axis=-1)
    a = jax.nn.relu(attn @ v)                                 # (N, L)
    # conv1 (torch cross-correlation, pad=1)
    a_m1 = jnp.pad(a, ((0, 0), (1, 0)))[:, :-1]
    a_p1 = jnp.pad(a, ((0, 0), (0, 1)))[:, 1:]
    w1 = p['w1']
    z1 = (a_m1[:, :, None] * w1[0] + a[:, :, None] * w1[1]
          + a_p1[:, :, None] * w1[2] + p['b1'][None, :, :])
    z1 = jax.nn.relu(z1)
    z1_m1 = jnp.pad(z1, ((0, 0), (1, 0), (0, 0)))[:, :-1, :]
    z1_p1 = jnp.pad(z1, ((0, 0), (0, 1), (0, 0)))[:, 1:, :]
    y = (jnp.einsum('nlc,co->nlo', z1_m1, p['w2k0'])
         + jnp.einsum('nlc,co->nlo', z1, p['w2k1'])
         + jnp.einsum('nlc,co->nlo', z1_p1, p['w2k2'])
         + p['b2'][None, :, :])
    return jax.nn.relu(y)


# --------------------------------- main ------------------------------------- #
if __name__ == "__main__":
    N, IN_FEATURES, CLASSES, OUT_CHANNELS, HID = 8, 32, 16, 8, 32

    key = jax.random.PRNGKey(0)
    ks = jax.random.split(key, 13)

    def lin(kw, kb, fan_in, fan_out):
        bound = 1.0 / math.sqrt(fan_in)
        w = jax.random.uniform(kw, (fan_in, fan_out), jnp.float32, -bound, bound)
        b = jax.random.uniform(kb, (1, fan_out), jnp.float32, -bound, bound)
        return w, b

    wq, bq = lin(ks[0], ks[1], IN_FEATURES, CLASSES)
    wk, bk = lin(ks[2], ks[3], IN_FEATURES, CLASSES)
    wv, bv = lin(ks[4], ks[5], IN_FEATURES, CLASSES)

    # conv1: torch weight (32, 1, 3) -> tap-major (3, 32); bias (1, 32)
    b1_bound = 1.0 / math.sqrt(1 * 3)
    w1 = jax.random.uniform(ks[6], (3, HID), jnp.float32, -b1_bound, b1_bound)
    b1 = jax.random.uniform(ks[7], (1, HID), jnp.float32, -b1_bound, b1_bound)

    # conv2: torch weight (Co, 32, 3) -> per-tap (32, Co); bias (1, Co)
    b2_bound = 1.0 / math.sqrt(HID * 3)
    w2k0 = jax.random.uniform(ks[8], (HID, OUT_CHANNELS), jnp.float32,
                              -b2_bound, b2_bound)
    w2k1 = jax.random.uniform(ks[9], (HID, OUT_CHANNELS), jnp.float32,
                              -b2_bound, b2_bound)
    w2k2 = jax.random.uniform(ks[10], (HID, OUT_CHANNELS), jnp.float32,
                              -b2_bound, b2_bound)
    b2 = jax.random.uniform(ks[11], (1, OUT_CHANNELS), jnp.float32,
                            -b2_bound, b2_bound)

    params = dict(wq=wq, bq=bq, wk=wk, bk=bk, wv=wv, bv=bv,
                  w1=w1, b1=b1, w2k0=w2k0, w2k1=w2k1, w2k2=w2k2, b2=b2)

    x = jax.random.normal(ks[12], (N, IN_FEATURES), jnp.float32)

    out = gofeature(x, params)
    out = jax.block_until_ready(out)

    ref = gofeature_ref(x, params)
    assert out.shape == (N, CLASSES, OUT_CHANNELS), out.shape
    np.testing.assert_allclose(np.asarray(out), np.asarray(ref),
                               rtol=1e-4, atol=5e-5)
    print("KERNEL_OK")
</pallas_src>

<mosaic_0001>
module attributes {stable_mosaic.version = 11 : i64} {
  func.func @qkv_proj_kernel(%arg0: i32, %arg1: memref<8x32xf32, #tpu.memory_space<vmem>>, %arg2: memref<32x16xf32, #tpu.memory_space<vmem>>, %arg3: memref<32x16xf32, #tpu.memory_space<vmem>>, %arg4: memref<32x17xf32, #tpu.memory_space<vmem>>, %arg5: memref<1x16xf32, #tpu.memory_space<vmem>>, %arg6: memref<1x16xf32, #tpu.memory_space<vmem>>, %arg7: memref<1x17xf32, #tpu.memory_space<vmem>>, %arg8: memref<8x16xf32, #tpu.memory_space<vmem>>, %arg9: memref<8x16xf32, #tpu.memory_space<vmem>>, %arg10: memref<8x17xf32, #tpu.memory_space<vmem>>) attributes {dimension_semantics = [#tpu.dimension_semantics<parallel>], iteration_bounds = array<i64: 1>, scalar_prefetch = 0 : i64, scratch_operands = 0 : i64, tpu.core_type = #tpu.core_type<tc>, window_params = [{transform_indices = @transform_0, window_bounds = array<i64: 8, 32>}, {pipeline_mode = #tpu.pipeline_mode<synchronous>, transform_indices = @transform_1, window_bounds = array<i64: 32, 16>}, {pipeline_mode = #tpu.pipeline_mode<synchronous>, transform_indices = @transform_2, window_bounds = array<i64: 32, 16>}, {pipeline_mode = #tpu.pipeline_mode<synchronous>, transform_indices = @transform_3, window_bounds = array<i64: 32, 17>}, {pipeline_mode = #tpu.pipeline_mode<synchronous>, transform_indices = @transform_4, window_bounds = array<i64: 1, 16>}, {pipeline_mode = #tpu.pipeline_mode<synchronous>, transform_indices = @transform_5, window_bounds = array<i64: 1, 16>}, {pipeline_mode = #tpu.pipeline_mode<synchronous>, transform_indices = @transform_6, window_bounds = array<i64: 1, 17>}, {transform_indices = @transform_7, window_bounds = array<i64: 8, 16>}, {transform_indices = @transform_8, window_bounds = array<i64: 8, 16>}, {transform_indices = @transform_9, window_bounds = array<i64: 8, 17>}]} {
    %c0 = arith.constant 0 : index
    %c0_0 = arith.constant 0 : index
    %0 = vector.load %arg1[%c0, %c0_0] : memref<8x32xf32, #tpu.memory_space<vmem>>, vector<8x32xf32>
    %c0_1 = arith.constant 0 : index
    %c0_2 = arith.constant 0 : index
    %1 = vector.load %arg2[%c0_1, %c0_2] : memref<32x16xf32, #tpu.memory_space<vmem>>, vector<32x16xf32>
    %cst = arith.constant dense<0.000000e+00> : vector<8x16xf32>
    %2 = tpu.matmul %0, %1, %cst {dimension_numbers = #tpu.dot_dimension_numbers<[1], [0], [0], [1], [0, 0, 1, 1], [], []>} : vector<8x32xf32>, vector<32x16xf32>, vector<8x16xf32> -> vector<8x16xf32>
    %c0_3 = arith.constant 0 : index
    %c0_4 = arith.constant 0 : index
    %3 = vector.load %arg5[%c0_3, %c0_4] : memref<1x16xf32, #tpu.memory_space<vmem>>, vector<1x16xf32>
    %4 = vector.broadcast %3 : vector<1x16xf32> to vector<8x16xf32>
    %5 = arith.addf %2, %4 : vector<8x16xf32>
    %c0_5 = arith.constant 0 : index
    %c0_6 = arith.constant 0 : index
    %6 = vector.load %arg8[%c0_5, %c0_6] : memref<8x16xf32, #tpu.memory_space<vmem>>, vector<8x16xf32>
    tpu.vector_store %arg8[%c0_5, %c0_6], %5 {strides = array<i32>} : memref<8x16xf32, #tpu.memory_space<vmem>>, vector<8x16xf32>,
    %c0_7 = arith.constant 0 : index
    %c0_8 = arith.constant 0 : index
    %7 = vector.load %arg3[%c0_7, %c0_8] : memref<32x16xf32, #tpu.memory_space<vmem>>, vector<32x16xf32>
    %cst_9 = arith.constant dense<0.000000e+00> : vector<8x16xf32>
    %8 = tpu.matmul %0, %7, %cst_9 {dimension_numbers = #tpu.dot_dimension_numbers<[1], [0], [0], [1], [0, 0, 1, 1], [], []>} : vector<8x32xf32>, vector<32x16xf32>, vector<8x16xf32> -> vector<8x16xf32>
    %c0_10 = arith.constant 0 : index
    %c0_11 = arith.constant 0 : index
    %9 = vector.load %arg6[%c0_10, %c0_11] : memref<1x16xf32, #tpu.memory_space<vmem>>, vector<1x16xf32>
    %10 = vector.broadcast %9 : vector<1x16xf32> to vector<8x16xf32>
    %11 = arith.addf %8, %10 : vector<8x16xf32>
    %c0_12 = arith.constant 0 : index
    %c0_13 = arith.constant 0 : index
    %12 = vector.load %arg9[%c0_12, %c0_13] : memref<8x16xf32, #tpu.memory_space<vmem>>, vector<8x16xf32>
    tpu.vector_store %arg9[%c0_12, %c0_13], %11 {strides = array<i32>} : memref<8x16xf32, #tpu.memory_space<vmem>>, vector<8x16xf32>,
    %c0_14 = arith.constant 0 : index
    %c0_15 = arith.constant 0 : index
    %13 = vector.load %arg4[%c0_14, %c0_15] : memref<32x17xf32, #tpu.memory_space<vmem>>, vector<32x17xf32>
    %cst_16 = arith.constant dense<0.000000e+00> : vector<8x17xf32>
    %14 = tpu.matmul %0, %13, %cst_16 {dimension_numbers = #tpu.dot_dimension_numbers<[1], [0], [0], [1], [0, 0, 1, 1], [], []>} : vector<8x32xf32>, vector<32x17xf32>, vector<8x17xf32> -> vector<8x17xf32>
    %c0_17 = arith.constant 0 : index
    %c0_18 = arith.constant 0 : index
    %15 = vector.load %arg7[%c0_17, %c0_18] : memref<1x17xf32, #tpu.memory_space<vmem>>, vector<1x17xf32>
    %16 = vector.broadcast %15 : vector<1x17xf32> to vector<8x17xf32>
    %17 = arith.addf %14, %16 : vector<8x17xf32>
    %c0_19 = arith.constant 0 : index
    %c0_20 = arith.constant 0 : index
    %18 = vector.load %arg10[%c0_19, %c0_20] : memref<8x17xf32, #tpu.memory_space<vmem>>, vector<8x17xf32>
    tpu.vector_store %arg10[%c0_19, %c0_20], %17 {strides = array<i32>} : memref<8x17xf32, #tpu.memory_space<vmem>>, vector<8x17xf32>,
    return
  }
  func.func @transform_0(%arg0: i32) -> (i32, i32) {
    %c0_i32 = arith.constant 0 : i32
    %c0_i32_0 = arith.constant 0 : i32
    return %arg0, %c0_i32 : i32, i32
  }
  func.func @transform_1(%arg0: i32) -> (i32, i32) {
    %c0_i32 = arith.constant 0 : i32
    %c0_i32_0 = arith.constant 0 : i32
    %c0_i32_1 = arith.constant 0 : i32
    return %c0_i32, %c0_i32_0 : i32, i32
  }
  func.func @transform_2(%arg0: i32) -> (i32, i32) {
    %c0_i32 = arith.constant 0 : i32
    %c0_i32_0 = arith.constant 0 : i32
    %c0_i32_1 = arith.constant 0 : i32
    return %c0_i32, %c0_i32_0 : i32, i32
  }
  func.func @transform_3(%arg0: i32) -> (i32, i32) {
    %c0_i32 = arith.constant 0 : i32
    %c0_i32_0 = arith.constant 0 : i32
    %c0_i32_1 = arith.constant 0 : i32
    return %c0_i32, %c0_i32_0 : i32, i32
  }
  func.func @transform_4(%arg0: i32) -> (i32, i32) {
    %c0_i32 = arith.constant 0 : i32
    %c0_i32_0 = arith.constant 0 : i32
    %c0_i32_1 = arith.constant 0 : i32
    return %c0_i32, %c0_i32_0 : i32, i32
  }
  func.func @transform_5(%arg0: i32) -> (i32, i32) {
    %c0_i32 = arith.constant 0 : i32
    %c0_i32_0 = arith.constant 0 : i32
    %c0_i32_1 = arith.constant 0 : i32
    return %c0_i32, %c0_i32_0 : i32, i32
  }
  func.func @transform_6(%arg0: i32) -> (i32, i32) {
    %c0_i32 = arith.constant 0 : i32
    %c0_i32_0 = arith.constant 0 : i32
    %c0_i32_1 = arith.constant 0 : i32
    return %c0_i32, %c0_i32_0 : i32, i32
  }
  func.func @transform_7(%arg0: i32) -> (i32, i32) {
    %c0_i32 = arith.constant 0 : i32
    %c0_i32_0 = arith.constant 0 : i32
    return %arg0, %c0_i32 : i32, i32
  }
  func.func @transform_8(%arg0: i32) -> (i32, i32) {
    %c0_i32 = arith.constant 0 : i32
    %c0_i32_0 = arith.constant 0 : i32
    return %arg0, %c0_i32 : i32, i32
  }
  func.func @transform_9(%arg0: i32) -> (i32, i32) {
    %c0_i32 = arith.constant 0 : i32
    %c0_i32_0 = arith.constant 0 : i32
    return %arg0, %c0_i32 : i32, i32
  }
}

</mosaic_0001>

<llo_original>
// kernel: tpu_custom_call.1
$region0: #{tpu_custom_call.1}
  #allocation0 [shape = 'u32[]', space=smem, size = 0x4, offset = 0x4, fixed_abs, tag = 'smem constant byte address 0x4 - core index']
  #allocation1 [shape = 'u32[144,128]{1,0:T(1,128)}', space=vmem, size = 0x12000, scoped, tag = 'internal scratch']
  %s0 = inlined_call_operand.vmem [shape: f32[8,32], index: 0, kind: input, shape index: {}]
  %s1 = inlined_call_operand.vmem [shape: f32[32,16], index: 1, kind: input, shape index: {}]
  %s2 = inlined_call_operand.vmem [shape: f32[32,16], index: 2, kind: input, shape index: {}]
  %s3 = inlined_call_operand.vmem [shape: f32[32,17], index: 3, kind: input, shape index: {}]
  %s4 = inlined_call_operand.vmem [shape: f32[1,16], index: 4, kind: input, shape index: {}]
  %s5 = inlined_call_operand.vmem [shape: f32[1,16], index: 5, kind: input, shape index: {}]
  %s6 = inlined_call_operand.vmem [shape: f32[1,17], index: 6, kind: input, shape index: {}]
  %s7 = inlined_call_operand.hbm [shape: f32[8,16], index: 7, kind: output, shape index: {0}]
  %s8 = inlined_call_operand.hbm [shape: f32[8,16], index: 8, kind: output, shape index: {1}]
  %s9 = inlined_call_operand.hbm [shape: f32[8,17], index: 9, kind: output, shape index: {2}]
  %10 = xla_tuple %s7, %s8, %s9
  %s11 = sld [smem:[#allocation0]]
  $region54: #{tpu_custom_call.1} parent=0
    _
  %s13 = ssub.s32 1, %s11
  %s14 = scalar_select 0, %s13, %s11
  $region1: #{tpu_custom_call.1} parent=0
    #allocation2 [shape = 'u8[4096]{0}', space=vmem, size = 0x1000, scoped, tag = 'output window, operand 0, single buffered']
    #allocation3 [shape = 's32[1]{0}', space=sflag, size = 0x4, scoped, tag = 'scoped memory for tpu_custom_call.1']
    #allocation4 [shape = 'u8[4096]{0}', space=vmem, size = 0x1000, scoped, tag = 'output window, operand 1, single buffered']
    #allocation5 [shape = 's32[1]{0}', space=sflag, size = 0x4, scoped, tag = 'scoped memory for tpu_custom_call.1']
    #allocation6 [shape = 'u8[4096]{0}', space=vmem, size = 0x1000, scoped, tag = 'output window, operand 2, single buffered']
    %15 = vsyncpa [#allocation3], 0
    %16 = vsyncpa [#allocation5], 0
    // Predicated region
    $region2: #{tpu_custom_call.1} parent=1 // pred_check
      _
    $region3: #{tpu_custom_call.1} parent=1 // pred_check_branch
      %18 = sbr.rel (0) target = $region5
    $region4: #{tpu_custom_call.1} parent=1 // pred_region
      _
    $region5: #{tpu_custom_call.1} parent=1 // pred_fallthru
      _
    // Predicated region
    $region6: #{tpu_custom_call.1} parent=1 // pred_check
      _
    $region7: #{tpu_custom_call.1} parent=1 // pred_check_branch
      %20 = sbr.rel (0) target = $region9
    $region8: #{tpu_custom_call.1} parent=1 // pred_region
      _
    $region9: #{tpu_custom_call.1} parent=1 // pred_fallthru
      _
    // Predicated region
    $region10: #{tpu_custom_call.1} parent=1 // pred_check
      _
    $region11: #{tpu_custom_call.1} parent=1 // pred_check_branch
      %22 = sbr.rel (0) target = $region13
    $region12: #{tpu_custom_call.1} parent=1 // pred_region
      _
    $region13: #{tpu_custom_call.1} parent=1 // pred_fallthru
      _
    // Predicated region
    $region14: #{tpu_custom_call.1} parent=1 // pred_check
      _
    $region15: #{tpu_custom_call.1} parent=1 // pred_check_branch
      %24 = sbr.rel (0) target = $region17
    $region16: #{tpu_custom_call.1} parent=1 // pred_region
      _
    $region17: #{tpu_custom_call.1} parent=1 // pred_fallthru
      _
    // Predicated region
    $region18: #{tpu_custom_call.1} parent=1 // pred_check
      _
    $region19: #{tpu_custom_call.1} parent=1 // pred_check_branch
      %26 = sbr.rel (0) target = $region21
    $region20: #{tpu_custom_call.1} parent=1 // pred_region
      _
    $region21: #{tpu_custom_call.1} parent=1 // pred_fallthru
      _
    // Predicated region
    $region22: #{tpu_custom_call.1} parent=1 // pred_check
      _
    $region23: #{tpu_custom_call.1} parent=1 // pred_check_branch
      %28 = sbr.rel (0) target = $region25
    $region24: #{tpu_custom_call.1} parent=1 // pred_region
      _
    $region25: #{tpu_custom_call.1} parent=1 // pred_fallthru
      _
    // Predicated region
    $region26: #{tpu_custom_call.1} parent=1 // pred_check
      _
    $region27: #{tpu_custom_call.1} parent=1 // pred_check_branch
      %30 = sbr.rel (0) target = $region29
    $region28: #{tpu_custom_call.1} parent=1 // pred_region
      _
    $region29: #{tpu_custom_call.1} parent=1 // pred_fallthru
      _
    %v31 = vld [vmem:[%s0] sm:$0xff]
    %v32 = vld [vmem:[%s1] sm:$0xff]
    %v33 = vld [vmem:[%s1 + $0x8] sm:$0xff]
    %v34 = vld [vmem:[%s1 + $0x10] sm:$0xff]
    %v35 = vld [vmem:[%s1 + $0x18] sm:$0xff]
    %v36 = vld [vmem:[%s4] sm:$0x1]
    %v38 = vlaneseq
    %v39 = vshrl.u32 %v38, 7
    %v40 = vsub.s32 0, %v39
    %v41 = vrot.slane %v36, %v40
    %vm43 = vcmask 261120
    %v45 = vsel %vm43, %v31, 0
    %47 = vmatprep.subr.mxu0 0.0
    %48 = vmatpush1.msra.mxu0 %v32
    %49 = vmatprep.subr.mxu0 0.0
    %50 = vmatpush1.msra.mxu0 %v33
    %51 = vmatprep.subr.mxu0 0.0
    %52 = vmatpush1.msra.mxu0 %v34
    %53 = vmatprep.subr.mxu0 0.0
    %54 = vmatpush1.msra.mxu0 %v35
    %55 = vmatprep.subr.mxu0 0.0
    %56 = vmatpush1.msra.mxu0 0.0
    %57 = vmatprep.subr.mxu0 0.0
    %58 = vmatpush1.msra.mxu0 0.0
    %59 = vmatprep.subr.mxu0 0.0
    %60 = vmatpush1.msra.mxu0 0.0
    %61 = vmatprep.subr.mxu0 0.0
    %62 = vmatpush1.msra.mxu0 0.0
    %63 = vmatprep.subr.mxu0 0.0
    %64 = vmatpush1.msra.mxu0 0.0
    %65 = vmatprep.subr.mxu0 0.0
    %66 = vmatpush1.msra.mxu0 0.0
    %67 = vmatprep.subr.mxu0 0.0
    %68 = vmatpush1.msra.mxu0 0.0
    %69 = vmatprep.subr.mxu0 0.0
    %70 = vmatpush1.msra.mxu0 0.0
    %71 = vmatprep.subr.mxu0 0.0
    %72 = vmatpush1.msra.mxu0 0.0
    %73 = vmatprep.subr.mxu0 0.0
    %74 = vmatpush1.msra.mxu0 0.0
    %75 = vmatprep.subr.mxu0 0.0
    %76 = vmatpush1.msra.mxu0 0.0
    %77 = vmatprep.subr.mxu0 0.0
    %78 = vmatpush1.msra.mxu0 0.0
    %79 = vmatprep.subr.mxu0 0.0
    %80 = vmatpush1.msra.mxu0 0.0
    %81 = vmatprep.subr.mxu0 0.0
    %82 = vmatpush1.msra.mxu0 0.0
    %83 = vmatprep.subr.mxu0 0.0
    %84 = vmatpush1.msra.mxu0 0.0
    %85 = vmatprep.subr.mxu0 0.0
    %86 = vmatpush1.msra.mxu0 0.0
    %87 = vmatprep.subr.mxu0 0.0
    %88 = vmatpush1.msra.mxu0 0.0
    %89 = vmatprep.subr.mxu0 0.0
    %90 = vmatpush1.msra.mxu0 0.0
    %91 = vmatprep.subr.mxu0 0.0
    %92 = vmatpush1.msra.mxu0 0.0
    %93 = vmatprep.subr.mxu0 0.0
    %94 = vmatpush1.msra.mxu0 0.0
    %95 = vmatprep.subr.mxu0 0.0
    %96 = vmatpush1.msra.mxu0 0.0
    %97 = vmatprep.subr.mxu0 0.0
    %98 = vmatpush1.msra.mxu0 0.0
    %99 = vmatprep.subr.mxu0 0.0
    %100 = vmatpush1.msra.mxu0 0.0
    %101 = vmatprep.subr.mxu0 0.0
    %102 = vmatpush1.msra.mxu0 0.0
    %103 = vmatprep.subr.mxu0 0.0
    %104 = vmatpush1.msra.mxu0 0.0
    %105 = vmatprep.subr.mxu0 0.0
    %106 = vmatpush1.msra.mxu0 0.0
    %107 = vmatprep.subr.mxu0 0.0
    %108 = vmatpush1.msra.mxu0 0.0
    %109 = vmatprep.subr.mxu0 0.0
    %110 = vmatpush1.msra.mxu0 0.0
    %111 = vmatprep.mubr.f32.mxu0 0.0
    %112 = vmatmul.mubr.f32.gmra.mrb[0].mxu0 %v45
    %v113 = vpop.f32.mrb[0].mxu0
    %v114 = vadd.f32 %v41, %v113
    %v115 = vpop.f32.mrb[0].mxu0
    %116 = vdwg.mxu0
    %vm117 = vcmask 130048
    %118 = vst.msk [vmem:[#allocation2] sm:$0xff] %vm117, %v114
    %v119 = vld [vmem:[%s2] sm:$0xff]
    %v120 = vld [vmem:[%s2 + $0x8] sm:$0xff]
    %v121 = vld [vmem:[%s2 + $0x10] sm:$0xff]
    %v122 = vld [vmem:[%s2 + $0x18] sm:$0xff]
    %v123 = vld [vmem:[%s5] sm:$0x1]
    %v125 = vlaneseq
    %v126 = vshrl.u32 %v125, 7
    %v127 = vsub.s32 0, %v126
    %v128 = vrot.slane %v123, %v127
    %130 = vmatprep.subr.mxu0 0.0
    %131 = vmatpush1.msra.mxu0 %v119
    %132 = vmatprep.subr.mxu0 0.0
    %133 = vmatpush1.msra.mxu0 %v120
    %134 = vmatprep.subr.mxu0 0.0
    %135 = vmatpush1.msra.mxu0 %v121
    %136 = vmatprep.subr.mxu0 0.0
    %137 = vmatpush1.msra.mxu0 %v122
    %138 = vmatprep.subr.mxu0 0.0
    %139 = vmatpush1.msra.mxu0 0.0
    %140 = vmatprep.subr.mxu0 0.0
    %141 = vmatpush1.msra.mxu0 0.0
    %142 = vmatprep.subr.mxu0 0.0
    %143 = vmatpush1.msra.mxu0 0.0
    %144 = vmatprep.subr.mxu0 0.0
    %145 = vmatpush1.msra.mxu0 0.0
    %146 = vmatprep.subr.mxu0 0.0
    %147 = vmatpush1.msra.mxu0 0.0
    %148 = vmatprep.subr.mxu0 0.0
    %149 = vmatpush1.msra.mxu0 0.0
    %150 = vmatprep.subr.mxu0 0.0
    %151 = vmatpush1.msra.mxu0 0.0
    %152 = vmatprep.subr.mxu0 0.0
    %153 = vmatpush1.msra.mxu0 0.0
    %154 = vmatprep.subr.mxu0 0.0
    %155 = vmatpush1.msra.mxu0 0.0
    %156 = vmatprep.subr.mxu0 0.0
    %157 = vmatpush1.msra.mxu0 0.0
    %158 = vmatprep.subr.mxu0 0.0
    %159 = vmatpush1.msra.mxu0 0.0
    %160 = vmatprep.subr.mxu0 0.0
    %161 = vmatpush1.msra.mxu0 0.0
    %162 = vmatprep.subr.mxu0 0.0
    %163 = vmatpush1.msra.mxu0 0.0
    %164 = vmatprep.subr.mxu0 0.0
    %165 = vmatpush1.msra.mxu0 0.0
    %166 = vmatprep.subr.mxu0 0.0
    %167 = vmatpush1.msra.mxu0 0.0
    %168 = vmatprep.subr.mxu0 0.0
    %169 = vmatpush1.msra.mxu0 0.0
    %170 = vmatprep.subr.mxu0 0.0
    %171 = vmatpush1.msra.mxu0 0.0
    %172 = vmatprep.subr.mxu0 0.0
    %173 = vmatpush1.msra.mxu0 0.0
    %174 = vmatprep.subr.mxu0 0.0
    %175 = vmatpush1.msra.mxu0 0.0
    %176 = vmatprep.subr.mxu0 0.0
    %177 = vmatpush1.msra.mxu0 0.0
    %178 = vmatprep.subr.mxu0 0.0
    %179 = vmatpush1.msra.mxu0 0.0
    %180 = vmatprep.subr.mxu0 0.0
    %181 = vmatpush1.msra.mxu0 0.0
    %182 = vmatprep.subr.mxu0 0.0
    %183 = vmatpush1.msra.mxu0 0.0
    %184 = vmatprep.subr.mxu0 0.0
    %185 = vmatpush1.msra.mxu0 0.0
    %186 = vmatprep.subr.mxu0 0.0
    %187 = vmatpush1.msra.mxu0 0.0
    %188 = vmatprep.subr.mxu0 0.0
    %189 = vmatpush1.msra.mxu0 0.0
    %190 = vmatprep.subr.mxu0 0.0
    %191 = vmatpush1.msra.mxu0 0.0
    %192 = vmatprep.subr.mxu0 0.0
    %193 = vmatpush1.msra.mxu0 0.0
    %194 = vmatprep.mubr.f32.mxu0 0.0
    %195 = vmatmul.mubr.f32.gmra.mrb[0].mxu0 %v45
    %v196 = vpop.f32.mrb[0].mxu0
    %v197 = vadd.f32 %v128, %v196
    %v198 = vpop.f32.mrb[0].mxu0
    %199 = vdwg.mxu0
    %200 = vst.msk [vmem:[#allocation4] sm:$0xff] %vm117, %v197
    %v201 = vld [vmem:[%s3] sm:$0xff]
    %v202 = vld [vmem:[%s3 + $0x8] sm:$0xff]
    %v203 = vld [vmem:[%s3 + $0x10] sm:$0xff]
    %v204 = vld [vmem:[%s3 + $0x18] sm:$0xff]
    %v205 = vld [vmem:[%s6] sm:$0x1]
    %v207 = vlaneseq
    %v208 = vshrl.u32 %v207, 7
    %v209 = vsub.s32 0, %v208
    %v210 = vrot.slane %v205, %v209
    %212 = vmatprep.subr.mxu0 0.0
    %213 = vmatpush1.msra.mxu0 %v201
    %214 = vmatprep.subr.mxu0 0.0
    %215 = vmatpush1.msra.mxu0 %v202
    %216 = vmatprep.subr.mxu0 0.0
    %217 = vmatpush1.msra.mxu0 %v203
    %218 = vmatprep.subr.mxu0 0.0
    %219 = vmatpush1.msra.mxu0 %v204
    %220 = vmatprep.subr.mxu0 0.0
    %221 = vmatpush1.msra.mxu0 0.0
    %222 = vmatprep.subr.mxu0 0.0
    %223 = vmatpush1.msra.mxu0 0.0
    %224 = vmatprep.subr.mxu0 0.0
    %225 = vmatpush1.msra.mxu0 0.0
    %226 = vmatprep.subr.mxu0 0.0
    %227 = vmatpush1.msra.mxu0 0.0
    %228 = vmatprep.subr.mxu0 0.0
    %229 = vmatpush1.msra.mxu0 0.0
    %230 = vmatprep.subr.mxu0 0.0
    %231 = vmatpush1.msra.mxu0 0.0
    %232 = vmatprep.subr.mxu0 0.0
    %233 = vmatpush1.msra.mxu0 0.0
    %234 = vmatprep.subr.mxu0 0.0
    %235 = vmatpush1.msra.mxu0 0.0
    %236 = vmatprep.subr.mxu0 0.0
    %237 = vmatpush1.msra.mxu0 0.0
    %238 = vmatprep.subr.mxu0 0.0
    %239 = vmatpush1.msra.mxu0 0.0
    %240 = vmatprep.subr.mxu0 0.0
    %241 = vmatpush1.msra.mxu0 0.0
    %242 = vmatprep.subr.mxu0 0.0
    %243 = vmatpush1.msra.mxu0 0.0
    %244 = vmatprep.subr.mxu0 0.0
    %245 = vmatpush1.msra.mxu0 0.0
    %246 = vmatprep.subr.mxu0 0.0
    %247 = vmatpush1.msra.mxu0 0.0
    %248 = vmatprep.subr.mxu0 0.0
    %249 = vmatpush1.msra.mxu0 0.0
    %250 = vmatprep.subr.mxu0 0.0
    %251 = vmatpush1.msra.mxu0 0.0
    %252 = vmatprep.subr.mxu0 0.0
    %253 = vmatpush1.msra.mxu0 0.0
    %254 = vmatprep.subr.mxu0 0.0
    %255 = vmatpush1.msra.mxu0 0.0
    %256 = vmatprep.subr.mxu0 0.0
    %257 = vmatpush1.msra.mxu0 0.0
    %258 = vmatprep.subr.mxu0 0.0
    %259 = vmatpush1.msra.mxu0 0.0
    %260 = vmatprep.subr.mxu0 0.0
    %261 = vmatpush1.msra.mxu0 0.0
    %262 = vmatprep.subr.mxu0 0.0
    %263 = vmatpush1.msra.mxu0 0.0
    %264 = vmatprep.subr.mxu0 0.0
    %265 = vmatpush1.msra.mxu0 0.0
    %266 = vmatprep.subr.mxu0 0.0
    %267 = vmatpush1.msra.mxu0 0.0
    %268 = vmatprep.subr.mxu0 0.0
    %269 = vmatpush1.msra.mxu0 0.0
    %270 = vmatprep.subr.mxu0 0.0
    %271 = vmatpush1.msra.mxu0 0.0
    %272 = vmatprep.subr.mxu0 0.0
    %273 = vmatpush1.msra.mxu0 0.0
    %274 = vmatprep.subr.mxu0 0.0
    %275 = vmatpush1.msra.mxu0 0.0
    %276 = vmatprep.mubr.f32.mxu0 0.0
    %277 = vmatmul.mubr.f32.gmra.mrb[0].mxu0 %v45
    %v278 = vpop.f32.mrb[0].mxu0
    %v279 = vadd.f32 %v210, %v278
    %v280 = vpop.f32.mrb[0].mxu0
    %281 = vdwg.mxu0
    %vm282 = vcmask 138240
    %283 = vst.msk [vmem:[#allocation6] sm:$0xff] %vm282, %v279
    // Predicated region
    $region30: #{tpu_custom_call.1} parent=1 // pred_check
      _
    $region31: #{tpu_custom_call.1} parent=1 // pred_check_branch
      %285 = sbr.rel (0) target = $region33
    $region32: #{tpu_custom_call.1} parent=1 // pred_region
      %s287 = ssub.s32 128, 128
      %288 = vsyncadd [#allocation3], %s287
      %s290 = sshll.u32 [#allocation2], 4
      %s291 = int_to_ptr.vmem [resolvable:$true] %s290
      %293 = dma.vmem_to_hbm [thread:$0]  %s291, 128, %s7, [#allocation3]
    $region33: #{tpu_custom_call.1} parent=1 // pred_fallthru
      _
    // Predicated region
    $region34: #{tpu_custom_call.1} parent=1 // pred_check
      _
    $region35: #{tpu_custom_call.1} parent=1 // pred_check_branch
      %295 = sbr.rel (0) target = $region37
    $region36: #{tpu_custom_call.1} parent=1 // pred_region
      %s297 = ssub.s32 128, 128
      %298 = vsyncadd [#allocation5], %s297
      %s300 = sshll.u32 [#allocation4], 4
      %s301 = int_to_ptr.vmem [resolvable:$true] %s300
      %303 = dma.vmem_to_hbm [thread:$0]  %s301, 128, %s8, [#allocation5]
    $region37: #{tpu_custom_call.1} parent=1 // pred_fallthru
      _
    // Predicated region
    $region38: #{tpu_custom_call.1} parent=1 // pred_check
      _
    $region39: #{tpu_custom_call.1} parent=1 // pred_check_branch
      %305 = sbr.rel (0) target = $region41
    $region40: #{tpu_custom_call.1} parent=1 // pred_region
      %s307 = ssub.s32 128, 128
      %308 = vsyncadd [#allocation5], %s307
      %s310 = sshll.u32 [#allocation6], 4
      %s311 = int_to_ptr.vmem [resolvable:$true] %s310
      %313 = dma.vmem_to_hbm [thread:$0]  %s311, 128, %s9, [#allocation5]
    $region41: #{tpu_custom_call.1} parent=1 // pred_fallthru
      _
    // Predicated region
    $region42: #{tpu_custom_call.1} parent=1 // pred_check
      _
    $region43: #{tpu_custom_call.1} parent=1 // pred_check_branch
      %315 = sbr.rel (0) target = $region45
    $region44: #{tpu_custom_call.1} parent=1 // pred_region
      %316 = dma.done [#allocation3], 128
    $region45: #{tpu_custom_call.1} parent=1 // pred_fallthru
      _
    // Predicated region
    $region46: #{tpu_custom_call.1} parent=1 // pred_check
      _
    $region47: #{tpu_custom_call.1} parent=1 // pred_check_branch
      %318 = sbr.rel (0) target = $region49
    $region48: #{tpu_custom_call.1} parent=1 // pred_region
      %319 = dma.done [#allocation5], 128
    $region49: #{tpu_custom_call.1} parent=1 // pred_fallthru
      _
    // Predicated region
    $region50: #{tpu_custom_call.1} parent=1 // pred_check
      _
    $region51: #{tpu_custom_call.1} parent=1 // pred_check_branch
      %321 = sbr.rel (0) target = $region53
    $region52: #{tpu_custom_call.1} parent=1 // pred_region
      %322 = dma.done [#allocation5], 128
    $region53: #{tpu_custom_call.1} parent=1 // pred_fallthru
      _
    %323 = vsyncpa [#allocation3], 1
    %324 = vsyncpa [#allocation5], 1

</llo_original>
